<compile_context>
chip_gen: v7x
topology: tpu7x:2x2x1
jax: 0.10.0
libtpu: 0.0.40
codegen_flags: <defaults>
</compile_context>

<pallas_src>
import functools

import jax
import jax.numpy as jnp
from jax import lax
from jax.experimental import pallas as pl
from jax.experimental.pallas import tpu as pltpu


def _round_up(x, m):
    return ((x + m - 1) // m) * m


def _full_spec(shape):
    zero = (0,) * len(shape)
    return pl.BlockSpec(shape, lambda *args, _z=zero: _z)


def _pad2(a, rows, cols):
    pr, pc = rows - a.shape[0], cols - a.shape[1]
    if pr == 0 and pc == 0:
        return a
    return jnp.pad(a, ((0, pr), (0, pc)))


def _pick_tiles(S):
    """Generation-aware flash tiles: tk=256/tq<=512 (v6e/v7x), tk=128/tq<=512 (v5e)."""
    kind = ""
    try:
        kind = jax.devices()[0].device_kind.lower()
    except Exception:
        pass
    if ("v5 lite" in kind) or ("v5e" in kind) or ("v5litepod" in kind):
        tq_pref, tk_pref = 512, 128
    else:
        tq_pref, tk_pref = 512, 256
    s128 = _round_up(S, 128)
    tk = min(tk_pref, s128)
    tq = min(tq_pref, s128)
    tq = max(tk, (tq // tk) * tk)   # keep tq a multiple of tk so one pad covers both
    return tq, tk


# ----------------------------------------------------------------------------
# Stage 1: fused [theta | g | phi] projection prepass (per-token, bf16 outputs)
# ----------------------------------------------------------------------------
def _proj_kernel(x_ref, w_ref, bth_ref, th_ref, gphi_ref, *, ci):
    """x:(1,ts,Cp) f32; w:(Cp,3*Cip) bf16; bth:(1,Cip) f32 -> theta:(1,ts,Cip),
    gphi:(1,ts,2*Cip) both bf16."""
    xb = x_ref[0].astype(jnp.bfloat16)
    proj = jnp.dot(xb, w_ref[...], preferred_element_type=jnp.float32)   # (ts, 3*Cip)
    th_ref[0] = (proj[:, :ci] + bth_ref[...]).astype(th_ref.dtype)
    gphi_ref[0] = proj[:, ci:].astype(gphi_ref.dtype)                    # [g | phi]


# ----------------------------------------------------------------------------
# Stage 2: flash-style attention + W_z/BN/residual epilogue
# ----------------------------------------------------------------------------
def _nl_flash_kernel(th_ref, gphi_ref, x_q_ref, wz_ref, bz_ref, z_ref,
                     m_sc, l_sc, acc_sc, *, ci, s_len, tk, needs_mask):
    """Grid = (batch, q_tile, kv_tile); kv_tile innermost ("arbitrary").

    th_ref   : (1, tq, Cip)  bf16 precomputed theta (q-indexed; stays resident)
    gphi_ref : (1, tk, 2Cip) bf16 precomputed [g | phi] (kv-indexed)
    x_q_ref  : (1, tq, Cp)   f32 residual input tile
    wz_ref   : (Cip, Cp)     bf16 W_z with eval-BN scale folded
    bz_ref   : (1, Cp)       f32 folded bias (b_z + b_g@W_z, BN affine applied)
    z_ref    : (1, tq, Cp)   f32 output (written at the last kv step)
    """
    ki = pl.program_id(2)

    @pl.when(ki == 0)
    def _init():
        m_sc[...] = jnp.full_like(m_sc, -jnp.inf)
        l_sc[...] = jnp.zeros_like(l_sc)
        acc_sc[...] = jnp.zeros_like(acc_sc)

    gphi = gphi_ref[0]                                              # (tk, 2*Cip) bf16
    g = gphi[:, :ci]
    phi = gphi[:, ci:]

    # scores = theta @ phi^T (bf16 operands, f32 accumulation, no transpose copy)
    s = lax.dot_general(th_ref[0], phi,
                        dimension_numbers=(((1,), (1,)), ((), ())),
                        preferred_element_type=jnp.float32)         # (tq, tk)

    if needs_mask:  # only emitted when S was padded up to the tile multiple
        col = ki * tk + lax.broadcasted_iota(jnp.int32, s.shape, 1)
        s = jnp.where(col < s_len, s, -1e30)

    m_prev = m_sc[...]
    m_new = jnp.maximum(m_prev, jnp.max(s, axis=-1, keepdims=True))
    alpha = jnp.exp(m_prev - m_new)
    p = jnp.exp(s - m_new)                                          # f32
    l_sc[...] = alpha * l_sc[...] + jnp.sum(p, axis=-1, keepdims=True)
    acc_sc[...] = alpha * acc_sc[...] + jnp.dot(
        p.astype(gphi.dtype), g, preferred_element_type=jnp.float32)
    m_sc[...] = m_new

    @pl.when(ki == pl.num_programs(2) - 1)
    def _finalize():
        y = acc_sc[...] / l_sc[...]                                 # exact divide
        w_y = (jnp.dot(y.astype(wz_ref.dtype), wz_ref[...],
                       preferred_element_type=jnp.float32)
               + bz_ref[...])                                       # (tq, Cp)
        z_ref[0] = (w_y + x_q_ref[0]).astype(z_ref.dtype)


# ----------------------------------------------------------------------------
# Wrapper
# ----------------------------------------------------------------------------
def nl_block_nd_pallas(x_nchw, params):
    """x_nchw: (N, C, H, W) float32.  Returns z: (N, C, H, W) float32."""
    N, C, H, W = x_nchw.shape
    S = H * W
    Ci = params["w_g"].shape[1]

    LANE = 128
    Cp = _round_up(C, LANE)
    Cip = _round_up(Ci, LANE)

    tq, tk = _pick_tiles(S)
    Sp = _round_up(S, tq)             # tk divides tq, so Sp is a multiple of both

    # NCHW -> (N, S, C) channel-last tokens; pad tokens/channels only if needed.
    x_sc = jnp.transpose(x_nchw.reshape(N, C, S), (0, 2, 1))
    if Sp != S or Cp != C:
        x_p = jnp.pad(x_sc, ((0, 0), (0, Sp - S), (0, Cp - C)))
    else:
        x_p = x_sc

    # Fused projection weights [theta | g | phi], bf16 for the MXU.
    # b_phi is dropped (cancels exactly in softmax); b_g is folded into the z bias.
    w_proj = jnp.concatenate([_pad2(params["w_theta"], Cp, Cip),
                              _pad2(params["w_g"], Cp, Cip),
                              _pad2(params["w_phi"], Cp, Cip)],
                             axis=1).astype(jnp.bfloat16)            # (Cp, 3*Cip)
    b_th = _pad2(params["b_theta"], 1, Cip)                          # f32

    # Fold eval-mode BN affine + b_z + (b_g commuted through softmax) into W_z.
    scale = params["bn_scale"]                                       # (1, C)
    w_z = params["w_z"] * scale                                      # (Ci, C)
    b_z = (params["b_z"] + params["b_g"] @ params["w_z"]) * scale + params["bn_shift"]
    w_z_p = _pad2(w_z, Cip, Cp).astype(jnp.bfloat16)
    b_z_p = _pad2(b_z, 1, Cp)                                        # f32

    cparams2 = pltpu.CompilerParams(
        dimension_semantics=("parallel", "parallel"),
        vmem_limit_bytes=32 * 1024 * 1024)
    cparams3 = pltpu.CompilerParams(
        dimension_semantics=("parallel", "parallel", "arbitrary"),
        vmem_limit_bytes=32 * 1024 * 1024)

    # ---- Stage 1: projection prepass (once per token) ----
    ts = tq
    theta, gphi = pl.pallas_call(
        functools.partial(_proj_kernel, ci=Cip),
        out_shape=(jax.ShapeDtypeStruct((N, Sp, Cip), jnp.bfloat16),
                   jax.ShapeDtypeStruct((N, Sp, 2 * Cip), jnp.bfloat16)),
        grid_spec=pltpu.PrefetchScalarGridSpec(
            num_scalar_prefetch=0,
            grid=(N, Sp // ts),
            in_specs=[
                pl.BlockSpec((1, ts, Cp), lambda b, i: (b, i, 0)),
                _full_spec((Cp, 3 * Cip)),
                _full_spec((1, Cip)),
            ],
            out_specs=(
                pl.BlockSpec((1, ts, Cip), lambda b, i: (b, i, 0)),
                pl.BlockSpec((1, ts, 2 * Cip), lambda b, i: (b, i, 0)),
            )),
        compiler_params=cparams2,
    )(x_p, w_proj, b_th)

    # ---- Stage 2: flash attention + epilogue ----
    out = pl.pallas_call(
        functools.partial(_nl_flash_kernel, ci=Cip, s_len=S, tk=tk,
                          needs_mask=(Sp != S)),
        out_shape=jax.ShapeDtypeStruct((N, Sp, Cp), jnp.float32),
        grid_spec=pltpu.PrefetchScalarGridSpec(
            num_scalar_prefetch=0,
            grid=(N, Sp // tq, Sp // tk),
            in_specs=[
                pl.BlockSpec((1, tq, Cip), lambda b, qi, ki: (b, qi, 0)),      # theta
                pl.BlockSpec((1, tk, 2 * Cip), lambda b, qi, ki: (b, ki, 0)),  # [g|phi]
                pl.BlockSpec((1, tq, Cp), lambda b, qi, ki: (b, qi, 0)),       # residual
                _full_spec((Cip, Cp)),                                         # W_z
                _full_spec((1, Cp)),                                           # bias
            ],
            out_specs=pl.BlockSpec((1, tq, Cp), lambda b, qi, ki: (b, qi, 0)),
            scratch_shapes=[
                pltpu.VMEM((tq, 1), jnp.float32),     # running max
                pltpu.VMEM((tq, 1), jnp.float32),     # running denominator
                pltpu.VMEM((tq, Cip), jnp.float32),   # output accumulator
            ]),
        compiler_params=cparams3,
    )(theta, gphi, x_p, w_z_p, b_z_p)

    z = out[:, :S, :C]                                               # drop pads
    return jnp.transpose(z, (0, 2, 1)).reshape(N, C, H, W)


# ----------------------------------------------------------------------------
# Pure-JAX f32 reference (un-folded, for the self-check)
# ----------------------------------------------------------------------------
def nl_block_nd_reference(x_nchw, params):
    N, C, H, W = x_nchw.shape
    S = H * W
    x = jnp.transpose(x_nchw.reshape(N, C, S), (0, 2, 1))            # (N, S, C)
    g = jnp.einsum("nsc,ci->nsi", x, params["w_g"]) + params["b_g"]
    th = jnp.einsum("nsc,ci->nsi", x, params["w_theta"]) + params["b_theta"]
    ph = jnp.einsum("nsc,ci->nsi", x, params["w_phi"]) + params["b_phi"]
    f = jnp.einsum("nsi,nti->nst", th, ph)
    f = jax.nn.softmax(f, axis=-1)
    y = jnp.einsum("nst,nti->nsi", f, g)
    wy = jnp.einsum("nsi,ic->nsc", y, params["w_z"]) + params["b_z"]
    wy = wy * params["bn_scale"] + params["bn_shift"]
    z = wy + x
    return jnp.transpose(z, (0, 2, 1)).reshape(N, C, H, W)


def make_params(key, in_channels, inter_channels):
    """Deterministic parameters following the module's shapes.

    PyTorch 1x1-conv weight is (out, in, 1, 1); stored pre-transposed as (in, out)
    so the kernel does x @ W.  BN is eval mode; the fold uses the general
    running-stats formula (scale = gamma/sqrt(var+eps), shift = beta - mean*scale).
    gamma/beta are non-zero so the block is not trivially the identity."""
    C, Ci = in_channels, inter_channels
    ks = jax.random.split(key, 10)
    p = {
        "w_g":     jax.random.normal(ks[0], (C, Ci), jnp.float32) * 0.1,
        "b_g":     jax.random.normal(ks[1], (1, Ci), jnp.float32) * 0.1,
        "w_theta": jax.random.normal(ks[2], (C, Ci), jnp.float32) * 0.1,
        "b_theta": jax.random.normal(ks[3], (1, Ci), jnp.float32) * 0.1,
        "w_phi":   jax.random.normal(ks[4], (C, Ci), jnp.float32) * 0.1,
        "b_phi":   jax.random.normal(ks[5], (1, Ci), jnp.float32) * 0.1,
        "w_z":     jax.random.normal(ks[6], (Ci, C), jnp.float32) * 0.1,
        "b_z":     jax.random.normal(ks[7], (1, C), jnp.float32) * 0.1,
    }
    gamma = jax.random.normal(ks[8], (1, C), jnp.float32) * 0.1 + 1.0
    beta = jax.random.normal(ks[9], (1, C), jnp.float32) * 0.1
    running_mean = jnp.zeros((1, C), jnp.float32)
    running_var = jnp.ones((1, C), jnp.float32)
    eps = 1e-5
    scale = gamma / jnp.sqrt(running_var + eps)
    p["bn_scale"] = scale
    p["bn_shift"] = beta - running_mean * scale
    return p


if __name__ == "__main__":
    # Small shapes: N=2, C=4 (-> inter_channels = 2), H=W=16, dimension=2.
    N, C, H, W = 2, 4, 16, 16
    Ci = C // 2

    key = jax.random.PRNGKey(0)
    kx, kp = jax.random.split(key)
    x = jax.random.normal(kx, (N, C, H, W), jnp.float32)
    params = make_params(kp, C, Ci)

    z = nl_block_nd_pallas(x, params)
    z = jax.block_until_ready(z)

    z_ref = nl_block_nd_reference(x, params)
    assert z.shape == (N, C, H, W)
    max_err = float(jnp.max(jnp.abs(z - z_ref)))
    # bf16 MXU operands (f32 accumulation / softmax stats) -> ~1e-3 level error here.
    assert jnp.allclose(z, z_ref, atol=1e-2, rtol=1e-2), max_err

    print("KERNEL_OK")
</pallas_src>

<mosaic_0001>
module attributes {stable_mosaic.version = 11 : i64} {
  func.func @_proj_kernel(%arg0: i32, %arg1: i32, %arg2: memref<1x256x128xf32, #tpu.memory_space<vmem>>, %arg3: memref<128x384xbf16, #tpu.memory_space<vmem>>, %arg4: memref<1x128xf32, #tpu.memory_space<vmem>>, %arg5: memref<1x256x128xbf16, #tpu.memory_space<vmem>>, %arg6: memref<1x256x256xbf16, #tpu.memory_space<vmem>>) attributes {dimension_semantics = [#tpu.dimension_semantics<parallel>, #tpu.dimension_semantics<parallel>], iteration_bounds = array<i64: 2, 1>, scalar_prefetch = 0 : i64, scratch_operands = 0 : i64, tpu.core_type = #tpu.core_type<tc>, window_params = [{transform_indices = @transform_0, window_bounds = array<i64: 1, 256, 128>}, {pipeline_mode = #tpu.pipeline_mode<synchronous>, transform_indices = @transform_1, window_bounds = array<i64: 128, 384>}, {pipeline_mode = #tpu.pipeline_mode<synchronous>, transform_indices = @transform_2, window_bounds = array<i64: 1, 128>}, {transform_indices = @transform_3, window_bounds = array<i64: 1, 256, 128>}, {transform_indices = @transform_4, window_bounds = array<i64: 1, 256, 256>}]} {
    %c0 = arith.constant 0 : index
    %c0_0 = arith.constant 0 : index
    %c0_1 = arith.constant 0 : index
    %0 = vector.load %arg2[%c0, %c0_0, %c0_1] : memref<1x256x128xf32, #tpu.memory_space<vmem>>, vector<1x256x128xf32>
    %1 = vector.shape_cast %0 : vector<1x256x128xf32> to vector<256x128xf32>
    %2 = arith.truncf %1 : vector<256x128xf32> to vector<256x128xbf16>
    %c0_2 = arith.constant 0 : index
    %c0_3 = arith.constant 0 : index
    %3 = vector.load %arg3[%c0_2, %c0_3] : memref<128x384xbf16, #tpu.memory_space<vmem>>, vector<128x384xbf16>
    %cst = arith.constant dense<0.000000e+00> : vector<256x384xf32>
    %4 = tpu.matmul %2, %3, %cst {dimension_numbers = #tpu.dot_dimension_numbers<[1], [0], [0], [1], [0, 0, 1, 1], [], []>} : vector<256x128xbf16>, vector<128x384xbf16>, vector<256x384xf32> -> vector<256x384xf32>
    %5 = vector.extract_strided_slice %4 {offsets = [0, 0], sizes = [256, 128], strides = [1, 1]} : vector<256x384xf32> to vector<256x128xf32>
    %c0_4 = arith.constant 0 : index
    %c0_5 = arith.constant 0 : index
    %6 = vector.load %arg4[%c0_4, %c0_5] : memref<1x128xf32, #tpu.memory_space<vmem>>, vector<1x128xf32>
    %7 = vector.broadcast %6 : vector<1x128xf32> to vector<256x128xf32>
    %8 = arith.addf %5, %7 : vector<256x128xf32>
    %9 = arith.truncf %8 : vector<256x128xf32> to vector<256x128xbf16>
    %c0_6 = arith.constant 0 : index
    %c0_7 = arith.constant 0 : index
    %c0_8 = arith.constant 0 : index
    %10 = vector.load %arg5[%c0_6, %c0_7, %c0_8] : memref<1x256x128xbf16, #tpu.memory_space<vmem>>, vector<1x256x128xbf16>
    %11 = vector.shape_cast %10 : vector<1x256x128xbf16> to vector<256x128xbf16>
    %12 = vector.shape_cast %9 : vector<256x128xbf16> to vector<1x256x128xbf16>
    tpu.vector_store %arg5[%c0_6, %c0_7, %c0_8], %12 {strides = array<i32>} : memref<1x256x128xbf16, #tpu.memory_space<vmem>>, vector<1x256x128xbf16>,
    %13 = vector.extract_strided_slice %4 {offsets = [0, 128], sizes = [256, 256], strides = [1, 1]} : vector<256x384xf32> to vector<256x256xf32>
    %14 = arith.truncf %13 : vector<256x256xf32> to vector<256x256xbf16>
    %c0_9 = arith.constant 0 : index
    %c0_10 = arith.constant 0 : index
    %c0_11 = arith.constant 0 : index
    %15 = vector.load %arg6[%c0_9, %c0_10, %c0_11] : memref<1x256x256xbf16, #tpu.memory_space<vmem>>, vector<1x256x256xbf16>
    %16 = vector.shape_cast %15 : vector<1x256x256xbf16> to vector<256x256xbf16>
    %17 = vector.shape_cast %14 : vector<256x256xbf16> to vector<1x256x256xbf16>
    tpu.vector_store %arg6[%c0_9, %c0_10, %c0_11], %17 {strides = array<i32>} : memref<1x256x256xbf16, #tpu.memory_space<vmem>>, vector<1x256x256xbf16>,
    return
  }
  func.func @transform_0(%arg0: i32, %arg1: i32) -> (i32, i32, i32) {
    %c0_i32 = arith.constant 0 : i32
    %c0_i32_0 = arith.constant 0 : i32
    return %arg0, %arg1, %c0_i32 : i32, i32, i32
  }
  func.func @transform_1(%arg0: i32, %arg1: i32) -> (i32, i32) {
    %c0_i32 = arith.constant 0 : i32
    %c0_i32_0 = arith.constant 0 : i32
    %c0_i32_1 = arith.constant 0 : i32
    return %c0_i32, %c0_i32_0 : i32, i32
  }
  func.func @transform_2(%arg0: i32, %arg1: i32) -> (i32, i32) {
    %c0_i32 = arith.constant 0 : i32
    %c0_i32_0 = arith.constant 0 : i32
    %c0_i32_1 = arith.constant 0 : i32
    return %c0_i32, %c0_i32_0 : i32, i32
  }
  func.func @transform_3(%arg0: i32, %arg1: i32) -> (i32, i32, i32) {
    %c0_i32 = arith.constant 0 : i32
    %c0_i32_0 = arith.constant 0 : i32
    return %arg0, %arg1, %c0_i32 : i32, i32, i32
  }
  func.func @transform_4(%arg0: i32, %arg1: i32) -> (i32, i32, i32) {
    %c0_i32 = arith.constant 0 : i32
    %c0_i32_0 = arith.constant 0 : i32
    return %arg0, %arg1, %c0_i32 : i32, i32, i32
  }
}

</mosaic_0001>

<llo_original>
// kernel: tpu_custom_call.1
$region0: #{tpu_custom_call.1}
  #allocation0 [shape = 'u32[]', space=smem, size = 0x4, offset = 0x4, fixed_abs, tag = 'smem constant byte address 0x4 - core index']
  #allocation1 [shape = 'u32[144,128]{1,0:T(1,128)}', space=vmem, size = 0x12000, scoped, tag = 'internal scratch']
  %s0 = inlined_call_operand.hbm [shape: f32[2,256,128], index: 0, kind: input, shape index: {}]
  %s1 = inlined_call_operand.hbm [shape: bf16[128,384], index: 1, kind: input, shape index: {}]
  %s2 = inlined_call_operand.vmem [shape: f32[1,128], index: 2, kind: input, shape index: {}]
  %s3 = inlined_call_operand.hbm [shape: bf16[2,256,128], index: 3, kind: output, shape index: {0}]
  %s4 = inlined_call_operand.hbm [shape: bf16[2,256,256], index: 4, kind: output, shape index: {1}]
  %5 = xla_tuple %s3, %s4
  %s6 = sld [smem:[#allocation0]]
  $region61: #{tpu_custom_call.1} parent=0
    _
  %s8 = ssub.s32 1, %s6
  %s9 = scalar_select 0, %s8, %s6
  $region1: #{tpu_custom_call.1} parent=0
    #allocation2 [shape = 'u8[262144]{0}', space=vmem, size = 0x40000, scoped, tag = 'input window, operand 0']
    #allocation3 [shape = 's32[2]{0}', space=sflag, size = 0x8, scoped, tag = 'scoped memory for tpu_custom_call.1']
    #allocation4 [shape = 's32[2]{0}', space=sflag, size = 0x8, scoped, tag = 'scoped memory for tpu_custom_call.1']
    #allocation5 [shape = 'u8[98304]{0}', space=vmem, size = 0x18000, scoped, tag = 'input window, operand 1, single buffered']
    #allocation6 [shape = 's32[1]{0}', space=sflag, size = 0x4, scoped, tag = 'scoped memory for tpu_custom_call.1']
    #allocation7 [shape = 'u8[131072]{0}', space=vmem, size = 0x20000, scoped, tag = 'output window, operand 0']
    #allocation8 [shape = 'u8[262144]{0}', space=vmem, size = 0x40000, scoped, tag = 'output window, operand 1']
    #allocation9 [shape = 's32[2]{0}', space=sflag, size = 0x8, scoped, tag = 'scoped memory for tpu_custom_call.1']
    %10 = vsyncpa [#allocation3], 0
    %s11 = scalar_lea.sflag [#allocation3], 1
    %12 = vsyncpa %s11, 0
    %13 = vsyncpa [#allocation6], 0
    %14 = vsyncpa [#allocation4], 0
    %s15 = scalar_lea.sflag [#allocation4], 1
    %16 = vsyncpa %s15, 0
    %17 = vsyncpa [#allocation9], 0
    %s18 = scalar_lea.sflag [#allocation9], 1
    %19 = vsyncpa %s18, 0
    loop: start=0, step=1, limit=4
    $region2: #{tpu_custom_call.1} parent=1 // loop_pre_header
      _
    $region3: #{tpu_custom_call.1} parent=1 // loop_header
      %s21 = sphi 0, %s25
      %p22 = scmp.ge.s32.totalorder %s21, 4
      %s28 = sphi 0, %s40
      %s29 = sphi 0, %s36
      %s30 = sphi 0, %s28
      %s31 = sphi 0, %s29
      %s32 = sphi 0, %s30
      %s33 = sphi 0, %s31
      %s45 = sphi 0, %s47
      %s48 = sphi 0, %s45
      %s49 = sphi 0, %s48
      %s65 = sphi 0, %s49
      %s69 = sphi 0, %s69
      %s71 = sphi 0, %s69
      %s72 = sphi 0, %s71
      %s86 = sphi 0, %s72
      %s90 = sphi 0, %s90
      %s92 = sphi 0, %s90
      %s93 = sphi 0, %s92
      %s107 = sphi 0, %s93
      %s115 = sphi 0, %s117
      %s118 = sphi 0, %s115
      %s119 = sphi 0, %s118
      %s135 = sphi 0, %s119
      %s143 = sphi 0, %s145
      %s146 = sphi 0, %s143
      %s147 = sphi 0, %s146
      %s163 = sphi 0, %s147
    $region4: #{tpu_custom_call.1} parent=1 // loop_header_branch
      %24 = sbr.rel (%p22) target = $region8
    $region5: #{tpu_custom_call.1} parent=1 // loop_body
      %s26 = ssub.s32 %s21, 1
      %s27 = ssub.s32 %s21, 2
      %s34 = sadd.s32 1, %s29
      %p35 = scmp.ge.s32.totalorder %s34, 1
      %s36 = scalar_select %p35, 0, %s34
      %s37 = sadd.s32 1, %s28
      %s38 = scalar_select %p35, %s37, %s28
      %p39 = scmp.ge.s32.totalorder %s38, 2
      %s40 = scalar_select %p39, 0, %s38
      %s41 = ssub.s32 %s28, %s40
      %s42 = ssub.s32 %s29, %s36
      %s43 = sor.u32 %s41, %s42
      %p44 = scmp.eq.s32.totalorder %s43, 0
      %s46 = sadd.s32 %s45, 1
      %s47 = scalar_select %p44, %s45, %s46
      %p50 = pneg %p44
      %p51 = scmp.eq.s32.totalorder %s21, 1
      %p52 = por %p50, %p51
      %p53 = scmp.ne.s32.totalorder %s45, %s48
      %p54 = scmp.eq.s32.totalorder %s21, 0
      %p55 = por %p53, %p54
      %p56 = scmp.ne.s32.totalorder %s45, %s48
      %p57 = scmp.eq.s32.totalorder %s26, 1
      %p58 = por %p56, %p57
      %p59 = scmp.ne.s32.totalorder %s48, %s49
      %p60 = scmp.eq.s32.totalorder %s26, 0
      %p61 = por %p59, %p60
      %p62 = scmp.ne.s32.totalorder %s48, %s49
      %p63 = scmp.eq.s32.totalorder %s27, 1
      %p64 = por %p62, %p63
      %p66 = scmp.ne.s32.totalorder %s49, %s65
      %p67 = scmp.eq.s32.totalorder %s27, 0
      %p68 = por %p66, %p67
      %s70 = sadd.s32 %s69, 1
      %p73 = scmp.eq.s32.totalorder %s21, 1
      %p74 = scmp.ne.s32.totalorder %s69, %s71
      %p75 = scmp.eq.s32.totalorder %s21, 0
      %p76 = por %p74, %p75
      %p77 = scmp.ne.s32.totalorder %s69, %s71
      %p78 = scmp.eq.s32.totalorder %s26, 1
      %p79 = por %p77, %p78
      %p80 = scmp.ne.s32.totalorder %s71, %s72
      %p81 = scmp.eq.s32.totalorder %s26, 0
      %p82 = por %p80, %p81
      %p83 = scmp.ne.s32.totalorder %s71, %s72
      %p84 = scmp.eq.s32.totalorder %s27, 1
      %p85 = por %p83, %p84
      %p87 = scmp.ne.s32.totalorder %s72, %s86
      %p88 = scmp.eq.s32.totalorder %s27, 0
      %p89 = por %p87, %p88
      %s91 = sadd.s32 %s90, 1
      %p94 = scmp.eq.s32.totalorder %s21, 1
      %p95 = scmp.ne.s32.totalorder %s90, %s92
      %p96 = scmp.eq.s32.totalorder %s21, 0
      %p97 = por %p95, %p96
      %p98 = scmp.ne.s32.totalorder %s90, %s92
      %p99 = scmp.eq.s32.totalorder %s26, 1
      %p100 = por %p98, %p99
      %p101 = scmp.ne.s32.totalorder %s92, %s93
      %p102 = scmp.eq.s32.totalorder %s26, 0
      %p103 = por %p101, %p102
      %p104 = scmp.ne.s32.totalorder %s92, %s93
      %p105 = scmp.eq.s32.totalorder %s27, 1
      %p106 = por %p104, %p105
      %p108 = scmp.ne.s32.totalorder %s93, %s107
      %p109 = scmp.eq.s32.totalorder %s27, 0
      %p110 = por %p108, %p109
      %s111 = ssub.s32 %s28, %s40
      %s112 = ssub.s32 %s29, %s36
      %s113 = sor.u32 %s111, %s112
      %p114 = scmp.eq.s32.totalorder %s113, 0
      %s116 = sadd.s32 %s115, 1
      %s117 = scalar_select %p114, %s115, %s116
      %p120 = pneg %p114
      %p121 = scmp.eq.s32.totalorder %s21, 1
      %p122 = por %p120, %p121
      %p123 = scmp.ne.s32.totalorder %s115, %s118
      %p124 = scmp.eq.s32.totalorder %s21, 0
      %p125 = por %p123, %p124
      %p126 = scmp.ne.s32.totalorder %s115, %s118
      %p127 = scmp.eq.s32.totalorder %s26, 1
      %p128 = por %p126, %p127
      %p129 = scmp.ne.s32.totalorder %s118, %s119
      %p130 = scmp.eq.s32.totalorder %s26, 0
      %p131 = por %p129, %p130
      %p132 = scmp.ne.s32.totalorder %s118, %s119
      %p133 = scmp.eq.s32.totalorder %s27, 1
      %p134 = por %p132, %p133
      %p136 = scmp.ne.s32.totalorder %s119, %s135
      %p137 = scmp.eq.s32.totalorder %s27, 0
      %p138 = por %p136, %p137
      %s139 = ssub.s32 %s28, %s40
      %s140 = ssub.s32 %s29, %s36
      %s141 = sor.u32 %s139, %s140
      %p142 = scmp.eq.s32.totalorder %s141, 0
      %s144 = sadd.s32 %s143, 1
      %s145 = scalar_select %p142, %s143, %s144
      %p148 = pneg %p142
      %p149 = scmp.eq.s32.totalorder %s21, 1
      %p150 = por %p148, %p149
      %p151 = scmp.ne.s32.totalorder %s143, %s146
      %p152 = scmp.eq.s32.totalorder %s21, 0
      %p153 = por %p151, %p152
      %p154 = scmp.ne.s32.totalorder %s143, %s146
      %p155 = scmp.eq.s32.totalorder %s26, 1
      %p156 = por %p154, %p155
      %p157 = scmp.ne.s32.totalorder %s146, %s147
      %p158 = scmp.eq.s32.totalorder %s26, 0
      %p159 = por %p157, %p158
      %p160 = scmp.ne.s32.totalorder %s146, %s147
      %p161 = scmp.eq.s32.totalorder %s27, 1
      %p162 = por %p160, %p161
      %p164 = scmp.ne.s32.totalorder %s147, %s163
      %p165 = scmp.eq.s32.totalorder %s27, 0
      %p166 = por %p164, %p165
      %p167 = scmp.le.s32.totalorder 1, %s21
      %p168 = scmp.lt.s32.totalorder %s21, 3
      %p169 = pnand %p167, %p168
      %p170 = pneg %p169
      // Predicated region
      $region9: #{tpu_custom_call.1} parent=5 // pred_check
        _
      $region10: #{tpu_custom_call.1} parent=5 // pred_check_branch
        %172 = sbr.rel (%p169) target = $region12
      $region11: #{tpu_custom_call.1} parent=5 // pred_region
        %s173 = ssub.s32 %s21, 1
        // Predicated region
        $region13: #{tpu_custom_call.1} parent=11 // pred_check
          %p174 = pneg %p82
        $region14: #{tpu_custom_call.1} parent=11 // pred_check_branch
          %176 = sbr.rel (%p174) target = $region16
        $region15: #{tpu_custom_call.1} parent=11 // pred_region
          %s178 = ssub.s32 3072, 3072
          %179 = vsyncadd [#allocation6], %s178
          %s180 = sshll.u32 [#allocation5], 4
          %s181 = int_to_ptr.vmem [resolvable:$true] %s180
          %186 = dma.hbm_to_vmem [thread:$0]  %s1, 3072, %s181, [#allocation6], 192, 192, 12
        $region16: #{tpu_custom_call.1} parent=11 // pred_fallthru
          _
        // Predicated region
        $region17: #{tpu_custom_call.1} parent=11 // pred_check
          %p187 = pneg %p103
        $region18: #{tpu_custom_call.1} parent=11 // pred_check_branch
          %189 = sbr.rel (%p187) target = $region20
        $region19: #{tpu_custom_call.1} parent=11 // pred_region
          _
        $region20: #{tpu_custom_call.1} parent=11 // pred_fallthru
          _
      $region12: #{tpu_custom_call.1} parent=5 // pred_fallthru
        _
      %p190 = scmp.lt.s32.totalorder %s21, 2
      // Predicated region
      $region21: #{tpu_custom_call.1} parent=5 // pred_check
        %p191 = pneg %p190
      $region22: #{tpu_custom_call.1} parent=5 // pred_check_branch
        %193 = sbr.rel (%p191) target = $region24
      $region23: #{tpu_custom_call.1} parent=5 // pred_region
        // Predicated region
        $region25: #{tpu_custom_call.1} parent=23 // pred_check
          %p194 = pneg %p55
        $region26: #{tpu_custom_call.1} parent=23 // pred_check_branch
          %196 = sbr.rel (%p194) target = $region28
        $region27: #{tpu_custom_call.1} parent=23 // pred_region
          %s197 = sand.u32 %s45, 1
          %s198 = scalar_lea.sflag [#allocation3], %s197
          %s199 = sand.u32 %s45, 1
          %s200 = smul.addr %s199, 256
          %s201 = scalar_lea.vmem [#allocation2], %s200
          %s202 = smul.u32 32, %s29
          %s204 = ssub.s32 4096, 4096
          %205 = vsyncadd %s198, %s204
          %s206 = smul.addr %s28, 32
          %s207 = sadd.s32 %s202, %s206
          %s208 = smul.addr %s207, 128
          %s209 = scalar_lea.hbm %s0, %s208
          %s210 = sshll.u32 %s201, 4
          %s211 = int_to_ptr.vmem [resolvable:$true] %s210
          %216 = dma.hbm_to_vmem [thread:$0]  %s209, 4096, %s211, %s198, 128, 128, 8
        $region28: #{tpu_custom_call.1} parent=23 // pred_fallthru
          _
      $region24: #{tpu_custom_call.1} parent=5 // pred_fallthru
        _
      %p217 = scmp.le.s32.totalorder 1, %s21
      %p218 = scmp.lt.s32.totalorder %s21, 3
      %p219 = pnand %p217, %p218
      %p220 = pneg %p219
      // Predicated region
      $region29: #{tpu_custom_call.1} parent=5 // pred_check
        _
      $region30: #{tpu_custom_call.1} parent=5 // pred_check_branch
        %222 = sbr.rel (%p219) target = $region32
      $region31: #{tpu_custom_call.1} parent=5 // pred_region
        %s223 = ssub.s32 %s21, 1
        %s224 = sand.u32 %s48, 1
        %s225 = scalar_lea.sflag [#allocation3], %s224
        %s226 = sand.u32 %s48, 1
        %s227 = smul.addr %s226, 256
        %s228 = scalar_lea.vmem [#allocation2], %s227
        // Predicated region
        $region33: #{tpu_custom_call.1} parent=31 // pred_check
          %p229 = pneg %p61
        $region34: #{tpu_custom_call.1} parent=31 // pred_check_branch
          %231 = sbr.rel (%p229) target = $region36
        $region35: #{tpu_custom_call.1} parent=31 // pred_region
          %232 = dma.done %s225, 4096
        $region36: #{tpu_custom_call.1} parent=31 // pred_fallthru
          _
        // Predicated region
        $region37: #{tpu_custom_call.1} parent=31 // pred_check
          %p233 = pneg %p82
        $region38: #{tpu_custom_call.1} parent=31 // pred_check_branch
          %235 = sbr.rel (%p233) target = $region40
        $region39: #{tpu_custom_call.1} parent=31 // pred_region
          %236 = dma.done [#allocation6], 3072
        $region40: #{tpu_custom_call.1} parent=31 // pred_fallthru
          _
        %s237 = sand.u32 %s48, 1
        %s238 = scalar_lea.sflag [#allocation3], %s237
        %s239 = sand.u32 %s48, 1
        %s240 = smul.addr %s239, 256
        %s241 = scalar_lea.vmem [#allocation2], %s240
        %p242 = pneg %p61
        %p243 = pneg %p58
        %p244 = pneg %p82
        %p245 = pneg %p79
        %p246 = pneg %p103
        %p247 = pneg %p100
        %p248 = pneg %p131
        %p249 = pneg %p128
        %s250 = sand.u32 %s118, 1
        %s251 = scalar_lea.sflag [#allocation4], %s250
        %s252 = sand.u32 %s118, 1
        %s253 = smul.addr %s252, 128
        %s254 = scalar_lea.vmem [#allocation7], %s253
        %p255 = pneg %p159
        %p256 = pneg %p156
        %s257 = sand.u32 %s146, 1
        %s258 = scalar_lea.sflag [#allocation9], %s257
        %s259 = sand.u32 %s146, 1
        %s260 = smul.addr %s259, 256
        %s261 = scalar_lea.vmem [#allocation8], %s260
        %s262 = smul.u32 32, %s31
        %s263 = smul.u32 32, %s31
        %s264 = smul.u32 32, %s31
        %v266 = vld [vmem:[%s228] sm:$0xff]
        %v267 = vld [vmem:[%s228 + $0x8] sm:$0xff]
        %v268 = vld [vmem:[%s228 + $0x10] sm:$0xff]
        %v269 = vld [vmem:[%s228 + $0x18] sm:$0xff]
        %v270 = vld [vmem:[%s228 + $0x20] sm:$0xff]
        %v271 = vld [vmem:[%s228 + $0x28] sm:$0xff]
        %v272 = vld [vmem:[%s228 + $0x30] sm:$0xff]
        %v273 = vld [vmem:[%s228 + $0x38] sm:$0xff]
        %v274 = vld [vmem:[%s228 + $0x40] sm:$0xff]
        %v275 = vld [vmem:[%s228 + $0x48] sm:$0xff]
        %v276 = vld [vmem:[%s228 + $0x50] sm:$0xff]
        %v277 = vld [vmem:[%s228 + $0x58] sm:$0xff]
        %v278 = vld [vmem:[%s228 + $0x60] sm:$0xff]
        %v279 = vld [vmem:[%s228 + $0x68] sm:$0xff]
        %v280 = vld [vmem:[%s228 + $0x70] sm:$0xff]
        %v281 = vld [vmem:[%s228 + $0x78] sm:$0xff]
        %v282 = vld [vmem:[%s228 + $0x80] sm:$0xff]
        %v283 = vld [vmem:[%s228 + $0x88] sm:$0xff]
        %v284 = vld [vmem:[%s228 + $0x90] sm:$0xff]
        %v285 = vld [vmem:[%s228 + $0x98] sm:$0xff]
        %v286 = vld [vmem:[%s228 + $0xa0] sm:$0xff]
        %v287 = vld [vmem:[%s228 + $0xa8] sm:$0xff]
        %v288 = vld [vmem:[%s228 + $0xb0] sm:$0xff]
        %v289 = vld [vmem:[%s228 + $0xb8] sm:$0xff]
        %v290 = vld [vmem:[%s228 + $0xc0] sm:$0xff]
        %v291 = vld [vmem:[%s228 + $0xc8] sm:$0xff]
        %v292 = vld [vmem:[%s228 + $0xd0] sm:$0xff]
        %v293 = vld [vmem:[%s228 + $0xd8] sm:$0xff]
        %v294 = vld [vmem:[%s228 + $0xe0] sm:$0xff]
        %v295 = vld [vmem:[%s228 + $0xe8] sm:$0xff]
        %v296 = vld [vmem:[%s228 + $0xf0] sm:$0xff]
        %v297 = vld [vmem:[%s228 + $0xf8] sm:$0xff]
        %v298 = vpack.c.bf16 %v267, %v266
        %v299 = vpack.c.bf16 %v269, %v268
        %v300 = vpack.c.bf16 %v271, %v270
        %v301 = vpack.c.bf16 %v273, %v272
        %v302 = vpack.c.bf16 %v275, %v274
        %v303 = vpack.c.bf16 %v277, %v276
        %v304 = vpack.c.bf16 %v279, %v278
        %v305 = vpack.c.bf16 %v281, %v280
        %v306 = vpack.c.bf16 %v283, %v282
        %v307 = vpack.c.bf16 %v285, %v284
        %v308 = vpack.c.bf16 %v287, %v286
        %v309 = vpack.c.bf16 %v289, %v288
        %v310 = vpack.c.bf16 %v291, %v290
        %v311 = vpack.c.bf16 %v293, %v292
        %v312 = vpack.c.bf16 %v295, %v294
        %v313 = vpack.c.bf16 %v297, %v296
        %v314 = vld [vmem:[#allocation5] sm:$0xff]
        %v315 = vld [vmem:[#allocation5 + $0x8] sm:$0xf]
        %v316 = vld [vmem:[#allocation5 + $0xc] sm:$0xff]
        %v317 = vld [vmem:[#allocation5 + $0x14] sm:$0xf]
        %v318 = vld [vmem:[#allocation5 + $0x18] sm:$0xff]
        %v319 = vld [vmem:[#allocation5 + $0x20] sm:$0xf]
        %v320 = vld [vmem:[#allocation5 + $0x24] sm:$0xff]
        %v321 = vld [vmem:[#allocation5 + $0x2c] sm:$0xf]
        %v322 = vld [vmem:[#allocation5 + $0x30] sm:$0xff]
        %v323 = vld [vmem:[#allocation5 + $0x38] sm:$0xf]
        %v324 = vld [vmem:[#allocation5 + $0x3c] sm:$0xff]
        %v325 = vld [vmem:[#allocation5 + $0x44] sm:$0xf]
        %v326 = vld [vmem:[#allocation5 + $0x48] sm:$0xff]
        %v327 = vld [vmem:[#allocation5 + $0x50] sm:$0xf]
        %v328 = vld [vmem:[#allocation5 + $0x54] sm:$0xff]
        %v329 = vld [vmem:[#allocation5 + $0x5c] sm:$0xf]
        %v330 = vld [vmem:[#allocation5 + $0x60] sm:$0xff]
        %v331 = vld [vmem:[#allocation5 + $0x68] sm:$0xf]
        %v332 = vld [vmem:[#allocation5 + $0x6c] sm:$0xff]
        %v333 = vld [vmem:[#allocation5 + $0x74] sm:$0xf]
        %v334 = vld [vmem:[#allocation5 + $0x78] sm:$0xff]
        %v335 = vld [vmem:[#allocation5 + $0x80] sm:$0xf]
        %v336 = vld [vmem:[#allocation5 + $0x84] sm:$0xff]
        %v337 = vld [vmem:[#allocation5 + $0x8c] sm:$0xf]
        %v338 = vld [vmem:[#allocation5 + $0x90] sm:$0xff]
        %v339 = vld [vmem:[#allocation5 + $0x98] sm:$0xf]
        %v340 = vld [vmem:[#allocation5 + $0x9c] sm:$0xff]
        %v341 = vld [vmem:[#allocation5 + $0xa4] sm:$0xf]
        %v342 = vld [vmem:[#allocation5 + $0xa8] sm:$0xff]
        %v343 = vld [vmem:[#allocation5 + $0xb0] sm:$0xf]
        %v344 = vld [vmem:[#allocation5 + $0xb4] sm:$0xff]
        %v345 = vld [vmem:[#allocation5 + $0xbc] sm:$0xf]
        %v378 = vunpack.c.l.b16 %v314
        %v379 = vunpack.c.h.b16 %v314
        %v380 = vunpack.c.l.b16 %v315
        %v381 = vunpack.c.l.b16 %v316
        %v382 = vunpack.c.h.b16 %v316
        %v383 = vunpack.c.l.b16 %v317
        %v384 = vunpack.c.l.b16 %v318
        %v385 = vunpack.c.h.b16 %v318
        %v386 = vunpack.c.l.b16 %v319
        %v387 = vunpack.c.l.b16 %v320
        %v388 = vunpack.c.h.b16 %v320
        %v389 = vunpack.c.l.b16 %v321
        %v390 = vunpack.c.l.b16 %v322
        %v391 = vunpack.c.h.b16 %v322
        %v392 = vunpack.c.l.b16 %v323
        %v393 = vunpack.c.l.b16 %v324
        %v394 = vunpack.c.h.b16 %v324
        %v395 = vunpack.c.l.b16 %v325
        %v396 = vunpack.c.l.b16 %v326
        %v397 = vunpack.c.h.b16 %v326
        %v398 = vunpack.c.l.b16 %v327
        %v399 = vunpack.c.l.b16 %v328
        %v400 = vunpack.c.h.b16 %v328
        %v401 = vunpack.c.l.b16 %v329
        %v402 = vunpack.c.l.b16 %v330
        %v403 = vunpack.c.h.b16 %v330
        %v404 = vunpack.c.l.b16 %v331
        %v405 = vunpack.c.l.b16 %v332
        %v406 = vunpack.c.h.b16 %v332
        %v407 = vunpack.c.l.b16 %v333
        %v408 = vunpack.c.l.b16 %v334
        %v409 = vunpack.c.h.b16 %v334
        %v410 = vunpack.c.l.b16 %v335
        %v411 = vunpack.c.l.b16 %v336
        %v412 = vunpack.c.h.b16 %v336
        %v413 = vunpack.c.l.b16 %v337
        %v414 = vunpack.c.l.b16 %v338
        %v415 = vunpack.c.h.b16 %v338
        %v416 = vunpack.c.l.b16 %v339
        %v417 = vunpack.c.l.b16 %v340
        %v418 = vunpack.c.h.b16 %v340
        %v419 = vunpack.c.l.b16 %v341
        %v420 = vunpack.c.l.b16 %v342
        %v421 = vunpack.c.h.b16 %v342
        %v422 = vunpack.c.l.b16 %v343
        %v423 = vunpack.c.l.b16 %v344
        %v424 = vunpack.c.h.b16 %v344
        %v425 = vunpack.c.l.b16 %v345
        %v426 = vpack.c.b16 %v381, %v378
        %v427 = vpack.c.b16 %v382, %v379
        %v428 = vpack.c.b16 %v383, %v380
        %v429 = vpack.c.b16 %v387, %v384
        %v430 = vpack.c.b16 %v388, %v385
        %v431 = vpack.c.b16 %v389, %v386
        %v432 = vpack.c.b16 %v393, %v390
        %v433 = vpack.c.b16 %v394, %v391
        %v434 = vpack.c.b16 %v395, %v392
        %v435 = vpack.c.b16 %v399, %v396
        %v436 = vpack.c.b16 %v400, %v397
        %v437 = vpack.c.b16 %v401, %v398
        %v438 = vpack.c.b16 %v405, %v402
        %v439 = vpack.c.b16 %v406, %v403
        %v440 = vpack.c.b16 %v407, %v404
        %v441 = vpack.c.b16 %v411, %v408
        %v442 = vpack.c.b16 %v412, %v409
        %v443 = vpack.c.b16 %v413, %v410
        %v444 = vpack.c.b16 %v417, %v414
        %v445 = vpack.c.b16 %v418, %v415
        %v446 = vpack.c.b16 %v419, %v416
        %v447 = vpack.c.b16 %v423, %v420
        %v448 = vpack.c.b16 %v424, %v421
        %v449 = vpack.c.b16 %v425, %v422
        %474 = vmatprep.subr.bf16.mxu0 %v427
        %475 = vmatpush1.bf16.msra.mxu0 %v426
        %476 = vmatprep.subr.bf16.mxu0 %v430
        %477 = vmatpush1.bf16.msra.mxu0 %v429
        %478 = vmatprep.subr.bf16.mxu0 %v433
        %479 = vmatpush1.bf16.msra.mxu0 %v432
        %480 = vmatprep.subr.bf16.mxu0 %v436
        %481 = vmatpush1.bf16.msra.mxu0 %v435
        %482 = vmatprep.subr.bf16.mxu0 %v439
        %483 = vmatpush1.bf16.msra.mxu0 %v438
        %484 = vmatprep.subr.bf16.mxu0 %v442
        %485 = vmatpush1.bf16.msra.mxu0 %v441
        %486 = vmatprep.subr.bf16.mxu0 %v445
        %487 = vmatpush1.bf16.msra.mxu0 %v444
        %488 = vmatprep.subr.bf16.mxu0 %v448
        %489 = vmatpush1.bf16.msra.mxu0 %v447
        %490 = vmatprep.subr.bf16.mxu0 0
        %491 = vmatpush1.bf16.msra.mxu0 0
        %492 = vmatprep.subr.bf16.mxu0 0
        %493 = vmatpush1.bf16.msra.mxu0 0
        %494 = vmatprep.subr.bf16.mxu0 0
        %495 = vmatpush1.bf16.msra.mxu0 0
        %496 = vmatprep.subr.bf16.mxu0 0
        %497 = vmatpush1.bf16.msra.mxu0 0
        %498 = vmatprep.subr.bf16.mxu0 0
        %499 = vmatpush1.bf16.msra.mxu0 0
        %500 = vmatprep.subr.bf16.mxu0 0
        %501 = vmatpush1.bf16.msra.mxu0 0
        %502 = vmatprep.subr.bf16.mxu0 0
        %503 = vmatpush1.bf16.msra.mxu0 0
        %504 = vmatprep.subr.bf16.mxu0 0
        %505 = vmatpush1.bf16.msra.mxu0 0
        %506 = vmatprep.mubr.bf16.mxu0 0
        %507 = vmatmul.mubr.bf16.gmra.mrb[0].mxu0 %v298
        %v508 = vpop.f32.mrb[0].mxu0
        %v509 = vadd.f32 0.0, %v508
        %v510 = vpop.f32.mrb[0].mxu0
        %v511 = vadd.f32 0.0, %v510
        %v512 = vpop.f32.mrb[0].mxu0
        %v513 = vadd.f32 0.0, %v512
        %v514 = vpop.f32.mrb[0].mxu0
        %v515 = vadd.f32 0.0, %v514
        %516 = vmatprep.mubr.bf16.mxu0 0
        %517 = vmatmul.mubr.bf16.gmra.mrb[0].mxu0 %v299
        %v518 = vpop.f32.mrb[0].mxu0
        %v519 = vadd.f32 0.0, %v518
        %v520 = vpop.f32.mrb[0].mxu0
        %v521 = vadd.f32 0.0, %v520
        %v522 = vpop.f32.mrb[0].mxu0
        %v523 = vadd.f32 0.0, %v522
        %v524 = vpop.f32.mrb[0].mxu0
        %v525 = vadd.f32 0.0, %v524
        %526 = vmatprep.mubr.bf16.mxu0 0
        %527 = vmatmul.mubr.bf16.gmra.mrb[0].mxu0 %v300
        %v528 = vpop.f32.mrb[0].mxu0
        %v529 = vadd.f32 0.0, %v528
        %v530 = vpop.f32.mrb[0].mxu0
        %v531 = vadd.f32 0.0, %v530
        %v532 = vpop.f32.mrb[0].mxu0
        %v533 = vadd.f32 0.0, %v532
        %v534 = vpop.f32.mrb[0].mxu0
        %v535 = vadd.f32 0.0, %v534
        %536 = vmatprep.mubr.bf16.mxu0 0
        %537 = vmatmul.mubr.bf16.gmra.mrb[0].mxu0 %v301
        %v538 = vpop.f32.mrb[0].mxu0
        %v539 = vadd.f32 0.0, %v538
        %v540 = vpop.f32.mrb[0].mxu0
        %v541 = vadd.f32 0.0, %v540
        %v542 = vpop.f32.mrb[0].mxu0
        %v543 = vadd.f32 0.0, %v542
        %v544 = vpop.f32.mrb[0].mxu0
        %v545 = vadd.f32 0.0, %v544
        %546 = vmatprep.mubr.bf16.mxu0 0
        %547 = vmatmul.mubr.bf16.gmra.mrb[0].mxu0 %v302
        %v548 = vpop.f32.mrb[0].mxu0
        %v549 = vadd.f32 0.0, %v548
        %v550 = vpop.f32.mrb[0].mxu0
        %v551 = vadd.f32 0.0, %v550
        %v552 = vpop.f32.mrb[0].mxu0
        %v553 = vadd.f32 0.0, %v552
        %v554 = vpop.f32.mrb[0].mxu0
        %v555 = vadd.f32 0.0, %v554
        %556 = vmatprep.mubr.bf16.mxu0 0
        %557 = vmatmul.mubr.bf16.gmra.mrb[0].mxu0 %v303
        %v558 = vpop.f32.mrb[0].mxu0
        %v559 = vadd.f32 0.0, %v558
        %v560 = vpop.f32.mrb[0].mxu0
        %v561 = vadd.f32 0.0, %v560
        %v562 = vpop.f32.mrb[0].mxu0
        %v563 = vadd.f32 0.0, %v562
        %v564 = vpop.f32.mrb[0].mxu0
        %v565 = vadd.f32 0.0, %v564
        %566 = vmatprep.mubr.bf16.mxu0 0
        %567 = vmatmul.mubr.bf16.gmra.mrb[0].mxu0 %v304
        %v568 = vpop.f32.mrb[0].mxu0
        %v569 = vadd.f32 0.0, %v568
        %v570 = vpop.f32.mrb[0].mxu0
        %v571 = vadd.f32 0.0, %v570
        %v572 = vpop.f32.mrb[0].mxu0
        %v573 = vadd.f32 0.0, %v572
        %v574 = vpop.f32.mrb[0].mxu0
        %v575 = vadd.f32 0.0, %v574
        %576 = vmatprep.mubr.bf16.mxu0 0
        %577 = vmatmul.mubr.bf16.gmra.mrb[0].mxu0 %v305
        %v578 = vpop.f32.mrb[0].mxu0
        %v579 = vadd.f32 0.0, %v578
        %v580 = vpop.f32.mrb[0].mxu0
        %v581 = vadd.f32 0.0, %v580
        %v582 = vpop.f32.mrb[0].mxu0
        %v583 = vadd.f32 0.0, %v582
        %v584 = vpop.f32.mrb[0].mxu0
        %v585 = vadd.f32 0.0, %v584
        %586 = vmatprep.mubr.bf16.mxu0 0
        %587 = vmatmul.mubr.bf16.gmra.mrb[0].mxu0 %v306
        %v588 = vpop.f32.mrb[0].mxu0
        %v589 = vadd.f32 0.0, %v588
        %v590 = vpop.f32.mrb[0].mxu0
        %v591 = vadd.f32 0.0, %v590
        %v592 = vpop.f32.mrb[0].mxu0
        %v593 = vadd.f32 0.0, %v592
        %v594 = vpop.f32.mrb[0].mxu0
        %v595 = vadd.f32 0.0, %v594
        %596 = vmatprep.mubr.bf16.mxu0 0
        %597 = vmatmul.mubr.bf16.gmra.mrb[0].mxu0 %v307
        %v598 = vpop.f32.mrb[0].mxu0
        %v599 = vadd.f32 0.0, %v598
        %v600 = vpop.f32.mrb[0].mxu0
        %v601 = vadd.f32 0.0, %v600
        %v602 = vpop.f32.mrb[0].mxu0
        %v603 = vadd.f32 0.0, %v602
        %v604 = vpop.f32.mrb[0].mxu0
        %v605 = vadd.f32 0.0, %v604
        %606 = vmatprep.mubr.bf16.mxu0 0
        %607 = vmatmul.mubr.bf16.gmra.mrb[0].mxu0 %v308
        %v608 = vpop.f32.mrb[0].mxu0
        %v609 = vadd.f32 0.0, %v608
        %v610 = vpop.f32.mrb[0].mxu0
        %v611 = vadd.f32 0.0, %v610
        %v612 = vpop.f32.mrb[0].mxu0
        %v613 = vadd.f32 0.0, %v612
        %v614 = vpop.f32.mrb[0].mxu0
        %v615 = vadd.f32 0.0, %v614
        %616 = vmatprep.mubr.bf16.mxu0 0
        %617 = vmatmul.mubr.bf16.gmra.mrb[0].mxu0 %v309
        %v618 = vpop.f32.mrb[0].mxu0
        %v619 = vadd.f32 0.0, %v618
        %v620 = vpop.f32.mrb[0].mxu0
        %v621 = vadd.f32 0.0, %v620
        %v622 = vpop.f32.mrb[0].mxu0
        %v623 = vadd.f32 0.0, %v622
        %v624 = vpop.f32.mrb[0].mxu0
        %v625 = vadd.f32 0.0, %v624
        %626 = vmatprep.mubr.bf16.mxu0 0
        %627 = vmatmul.mubr.bf16.gmra.mrb[0].mxu0 %v310
        %v628 = vpop.f32.mrb[0].mxu0
        %v629 = vadd.f32 0.0, %v628
        %v630 = vpop.f32.mrb[0].mxu0
        %v631 = vadd.f32 0.0, %v630
        %v632 = vpop.f32.mrb[0].mxu0
        %v633 = vadd.f32 0.0, %v632
        %v634 = vpop.f32.mrb[0].mxu0
        %v635 = vadd.f32 0.0, %v634
        %636 = vmatprep.mubr.bf16.mxu0 0
        %637 = vmatmul.mubr.bf16.gmra.mrb[0].mxu0 %v311
        %v638 = vpop.f32.mrb[0].mxu0
        %v639 = vadd.f32 0.0, %v638
        %v640 = vpop.f32.mrb[0].mxu0
        %v641 = vadd.f32 0.0, %v640
        %v642 = vpop.f32.mrb[0].mxu0
        %v643 = vadd.f32 0.0, %v642
        %v644 = vpop.f32.mrb[0].mxu0
        %v645 = vadd.f32 0.0, %v644
        %646 = vmatprep.mubr.bf16.mxu0 0
        %647 = vmatmul.mubr.bf16.gmra.mrb[0].mxu0 %v312
        %v648 = vpop.f32.mrb[0].mxu0
        %v649 = vadd.f32 0.0, %v648
        %v650 = vpop.f32.mrb[0].mxu0
        %v651 = vadd.f32 0.0, %v650
        %v652 = vpop.f32.mrb[0].mxu0
        %v653 = vadd.f32 0.0, %v652
        %v654 = vpop.f32.mrb[0].mxu0
        %v655 = vadd.f32 0.0, %v654
        %656 = vmatprep.mubr.bf16.mxu0 0
        %657 = vmatmul.mubr.bf16.gmra.mrb[0].mxu0 %v313
        %v658 = vpop.f32.mrb[0].mxu0
        %v659 = vadd.f32 0.0, %v658
        %v660 = vpop.f32.mrb[0].mxu0
        %v661 = vadd.f32 0.0, %v660
        %v662 = vpop.f32.mrb[0].mxu0
        %v663 = vadd.f32 0.0, %v662
        %v664 = vpop.f32.mrb[0].mxu0
        %v665 = vadd.f32 0.0, %v664
        %666 = vdwg.mxu0
        %667 = vmatprep.subr.bf16.mxu0 0
        %668 = vmatpush1.bf16.msra.mxu0 %v428
        %669 = vmatprep.subr.bf16.mxu0 0
        %670 = vmatpush1.bf16.msra.mxu0 %v431
        %671 = vmatprep.subr.bf16.mxu0 0
        %672 = vmatpush1.bf16.msra.mxu0 %v434
        %673 = vmatprep.subr.bf16.mxu0 0
        %674 = vmatpush1.bf16.msra.mxu0 %v437
        %675 = vmatprep.subr.bf16.mxu0 0
        %676 = vmatpush1.bf16.msra.mxu0 %v440
        %677 = vmatprep.subr.bf16.mxu0 0
        %678 = vmatpush1.bf16.msra.mxu0 %v443
        %679 = vmatprep.subr.bf16.mxu0 0
        %680 = vmatpush1.bf16.msra.mxu0 %v446
        %681 = vmatprep.subr.bf16.mxu0 0
        %682 = vmatpush1.bf16.msra.mxu0 %v449
        %683 = vmatprep.subr.bf16.mxu0 0
        %684 = vmatpush1.bf16.msra.mxu0 0
        %685 = vmatprep.subr.bf16.mxu0 0
        %686 = vmatpush1.bf16.msra.mxu0 0
        %687 = vmatprep.subr.bf16.mxu0 0
        %688 = vmatpush1.bf16.msra.mxu0 0
        %689 = vmatprep.subr.bf16.mxu0 0
        %690 = vmatpush1.bf16.msra.mxu0 0
        %691 = vmatprep.subr.bf16.mxu0 0
        %692 = vmatpush1.bf16.msra.mxu0 0
        %693 = vmatprep.subr.bf16.mxu0 0
        %694 = vmatpush1.bf16.msra.mxu0 0
        %695 = vmatprep.subr.bf16.mxu0 0
        %696 = vmatpush1.bf16.msra.mxu0 0
        %697 = vmatprep.subr.bf16.mxu0 0
        %698 = vmatpush1.bf16.msra.mxu0 0
        %699 = vmatprep.mubr.bf16.mxu0 0
        %700 = vmatmul.mubr.bf16.gmra.mrb[0].mxu0 %v298
        %v701 = vpop.f32.mrb[0].mxu0
        %v702 = vadd.f32 0.0, %v701
        %v703 = vpop.f32.mrb[0].mxu0
        %v704 = vpop.f32.mrb[0].mxu0
        %v705 = vadd.f32 0.0, %v704
        %v706 = vpop.f32.mrb[0].mxu0
        %707 = vmatprep.mubr.bf16.mxu0 0
        %708 = vmatmul.mubr.bf16.gmra.mrb[0].mxu0 %v299
        %v709 = vpop.f32.mrb[0].mxu0
        %v710 = vadd.f32 0.0, %v709
        %v711 = vpop.f32.mrb[0].mxu0
        %v712 = vpop.f32.mrb[0].mxu0
        %v713 = vadd.f32 0.0, %v712
        %v714 = vpop.f32.mrb[0].mxu0
        %715 = vmatprep.mubr.bf16.mxu0 0
        %716 = vmatmul.mubr.bf16.gmra.mrb[0].mxu0 %v300
        %v717 = vpop.f32.mrb[0].mxu0
        %v718 = vadd.f32 0.0, %v717
        %v719 = vpop.f32.mrb[0].mxu0
        %v720 = vpop.f32.mrb[0].mxu0
        %v721 = vadd.f32 0.0, %v720
        %v722 = vpop.f32.mrb[0].mxu0
        %723 = vmatprep.mubr.bf16.mxu0 0
        %724 = vmatmul.mubr.bf16.gmra.mrb[0].mxu0 %v301
        %v725 = vpop.f32.mrb[0].mxu0
        %v726 = vadd.f32 0.0, %v725
        %v727 = vpop.f32.mrb[0].mxu0
        %v728 = vpop.f32.mrb[0].mxu0
        %v729 = vadd.f32 0.0, %v728
        %v730 = vpop.f32.mrb[0].mxu0
        %731 = vmatprep.mubr.bf16.mxu0 0
        %732 = vmatmul.mubr.bf16.gmra.mrb[0].mxu0 %v302
        %v733 = vpop.f32.mrb[0].mxu0
        %v734 = vadd.f32 0.0, %v733
        %v735 = vpop.f32.mrb[0].mxu0
        %v736 = vpop.f32.mrb[0].mxu0
        %v737 = vadd.f32 0.0, %v736
        %v738 = vpop.f32.mrb[0].mxu0
        %739 = vmatprep.mubr.bf16.mxu0 0
        %740 = vmatmul.mubr.bf16.gmra.mrb[0].mxu0 %v303
        %v741 = vpop.f32.mrb[0].mxu0
        %v742 = vadd.f32 0.0, %v741
        %v743 = vpop.f32.mrb[0].mxu0
        %v744 = vpop.f32.mrb[0].mxu0
        %v745 = vadd.f32 0.0, %v744
        %v746 = vpop.f32.mrb[0].mxu0
        %747 = vmatprep.mubr.bf16.mxu0 0
        %748 = vmatmul.mubr.bf16.gmra.mrb[0].mxu0 %v304
        %v749 = vpop.f32.mrb[0].mxu0
        %v750 = vadd.f32 0.0, %v749
        %v751 = vpop.f32.mrb[0].mxu0
        %v752 = vpop.f32.mrb[0].mxu0
        %v753 = vadd.f32 0.0, %v752
        %v754 = vpop.f32.mrb[0].mxu0
        %755 = vmatprep.mubr.bf16.mxu0 0
        %756 = vmatmul.mubr.bf16.gmra.mrb[0].mxu0 %v305
        %v757 = vpop.f32.mrb[0].mxu0
        %v758 = vadd.f32 0.0, %v757
        %v759 = vpop.f32.mrb[0].mxu0
        %v760 = vpop.f32.mrb[0].mxu0
        %v761 = vadd.f32 0.0, %v760
        %v762 = vpop.f32.mrb[0].mxu0
        %763 = vmatprep.mubr.bf16.mxu0 0
        %764 = vmatmul.mubr.bf16.gmra.mrb[0].mxu0 %v306
        %v765 = vpop.f32.mrb[0].mxu0
        %v766 = vadd.f32 0.0, %v765
        %v767 = vpop.f32.mrb[0].mxu0
        %v768 = vpop.f32.mrb[0].mxu0
        %v769 = vadd.f32 0.0, %v768
        %v770 = vpop.f32.mrb[0].mxu0
        %771 = vmatprep.mubr.bf16.mxu0 0
        %772 = vmatmul.mubr.bf16.gmra.mrb[0].mxu0 %v307
        %v773 = vpop.f32.mrb[0].mxu0
        %v774 = vadd.f32 0.0, %v773
        %v775 = vpop.f32.mrb[0].mxu0
        %v776 = vpop.f32.mrb[0].mxu0
        %v777 = vadd.f32 0.0, %v776
        %v778 = vpop.f32.mrb[0].mxu0
        %779 = vmatprep.mubr.bf16.mxu0 0
        %780 = vmatmul.mubr.bf16.gmra.mrb[0].mxu0 %v308
        %v781 = vpop.f32.mrb[0].mxu0
        %v782 = vadd.f32 0.0, %v781
        %v783 = vpop.f32.mrb[0].mxu0
        %v784 = vpop.f32.mrb[0].mxu0
        %v785 = vadd.f32 0.0, %v784
        %v786 = vpop.f32.mrb[0].mxu0
        %787 = vmatprep.mubr.bf16.mxu0 0
        %788 = vmatmul.mubr.bf16.gmra.mrb[0].mxu0 %v309
        %v789 = vpop.f32.mrb[0].mxu0
        %v790 = vadd.f32 0.0, %v789
        %v791 = vpop.f32.mrb[0].mxu0
        %v792 = vpop.f32.mrb[0].mxu0
        %v793 = vadd.f32 0.0, %v792
        %v794 = vpop.f32.mrb[0].mxu0
        %795 = vmatprep.mubr.bf16.mxu0 0
        %796 = vmatmul.mubr.bf16.gmra.mrb[0].mxu0 %v310
        %v797 = vpop.f32.mrb[0].mxu0
        %v798 = vadd.f32 0.0, %v797
        %v799 = vpop.f32.mrb[0].mxu0
        %v800 = vpop.f32.mrb[0].mxu0
        %v801 = vadd.f32 0.0, %v800
        %v802 = vpop.f32.mrb[0].mxu0
        %803 = vmatprep.mubr.bf16.mxu0 0
        %804 = vmatmul.mubr.bf16.gmra.mrb[0].mxu0 %v311
        %v805 = vpop.f32.mrb[0].mxu0
        %v806 = vadd.f32 0.0, %v805
        %v807 = vpop.f32.mrb[0].mxu0
        %v808 = vpop.f32.mrb[0].mxu0
        %v809 = vadd.f32 0.0, %v808
        %v810 = vpop.f32.mrb[0].mxu0
        %811 = vmatprep.mubr.bf16.mxu0 0
        %812 = vmatmul.mubr.bf16.gmra.mrb[0].mxu0 %v312
        %v813 = vpop.f32.mrb[0].mxu0
        %v814 = vadd.f32 0.0, %v813
        %v815 = vpop.f32.mrb[0].mxu0
        %v816 = vpop.f32.mrb[0].mxu0
        %v817 = vadd.f32 0.0, %v816
        %v818 = vpop.f32.mrb[0].mxu0
        %819 = vmatprep.mubr.bf16.mxu0 0
        %820 = vmatmul.mubr.bf16.gmra.mrb[0].mxu0 %v313
        %v821 = vpop.f32.mrb[0].mxu0
        %v822 = vadd.f32 0.0, %v821
        %v823 = vpop.f32.mrb[0].mxu0
        %v824 = vpop.f32.mrb[0].mxu0
        %v825 = vadd.f32 0.0, %v824
        %v826 = vpop.f32.mrb[0].mxu0
        %827 = vdwg.mxu0
        %v828 = vld [vmem:[%s2] sm:$0x1]
        %v830 = vlaneseq
        %v831 = vshrl.u32 %v830, 7
        %v832 = vsub.s32 0, %v831
        %v833 = vrot.slane %v828, %v832
        %v835 = vadd.f32 %v509, %v833
        %v836 = vadd.f32 %v513, %v833
        %v837 = vadd.f32 %v519, %v833
        %v838 = vadd.f32 %v523, %v833
        %v839 = vadd.f32 %v529, %v833
        %v840 = vadd.f32 %v533, %v833
        %v841 = vadd.f32 %v539, %v833
        %v842 = vadd.f32 %v543, %v833
        %v843 = vadd.f32 %v549, %v833
        %v844 = vadd.f32 %v553, %v833
        %v845 = vadd.f32 %v559, %v833
        %v846 = vadd.f32 %v563, %v833
        %v847 = vadd.f32 %v569, %v833
        %v848 = vadd.f32 %v573, %v833
        %v849 = vadd.f32 %v579, %v833
        %v850 = vadd.f32 %v583, %v833
        %v851 = vadd.f32 %v589, %v833
        %v852 = vadd.f32 %v593, %v833
        %v853 = vadd.f32 %v599, %v833
        %v854 = vadd.f32 %v603, %v833
        %v855 = vadd.f32 %v609, %v833
        %v856 = vadd.f32 %v613, %v833
        %v857 = vadd.f32 %v619, %v833
        %v858 = vadd.f32 %v623, %v833
        %v859 = vadd.f32 %v629, %v833
        %v860 = vadd.f32 %v633, %v833
        %v861 = vadd.f32 %v639, %v833
        %v862 = vadd.f32 %v643, %v833
        %v863 = vadd.f32 %v649, %v833
        %v864 = vadd.f32 %v653, %v833
        %v865 = vadd.f32 %v659, %v833
        %v866 = vadd.f32 %v663, %v833
        %v867 = vpack.c.bf16 %v836, %v835
        %v868 = vpack.c.bf16 %v838, %v837
        %v869 = vpack.c.bf16 %v840, %v839
        %v870 = vpack.c.bf16 %v842, %v841
        %v871 = vpack.c.bf16 %v844, %v843
        %v872 = vpack.c.bf16 %v846, %v845
        %v873 = vpack.c.bf16 %v848, %v847
        %v874 = vpack.c.bf16 %v850, %v849
        %v875 = vpack.c.bf16 %v852, %v851
        %v876 = vpack.c.bf16 %v854, %v853
        %v877 = vpack.c.bf16 %v856, %v855
        %v878 = vpack.c.bf16 %v858, %v857
        %v879 = vpack.c.bf16 %v860, %v859
        %v880 = vpack.c.bf16 %v862, %v861
        %v881 = vpack.c.bf16 %v864, %v863
        %v882 = vpack.c.bf16 %v866, %v865
        %v899 = vunpack.c.l.b16 %v867
        %v900 = vunpack.c.h.b16 %v867
        %v901 = vunpack.c.l.b16 %v868
        %v902 = vunpack.c.h.b16 %v868
        %v903 = vunpack.c.l.b16 %v869
        %v904 = vunpack.c.h.b16 %v869
        %v905 = vunpack.c.l.b16 %v870
        %v906 = vunpack.c.h.b16 %v870
        %v907 = vunpack.c.l.b16 %v871
        %v908 = vunpack.c.h.b16 %v871
        %v909 = vunpack.c.l.b16 %v872
        %v910 = vunpack.c.h.b16 %v872
        %v911 = vunpack.c.l.b16 %v873
        %v912 = vunpack.c.h.b16 %v873
        %v913 = vunpack.c.l.b16 %v874
        %v914 = vunpack.c.h.b16 %v874
        %v915 = vunpack.c.l.b16 %v875
        %v916 = vunpack.c.h.b16 %v875
        %v917 = vunpack.c.l.b16 %v876
        %v918 = vunpack.c.h.b16 %v876
        %v919 = vunpack.c.l.b16 %v877
        %v920 = vunpack.c.h.b16 %v877
        %v921 = vunpack.c.l.b16 %v878
        %v922 = vunpack.c.h.b16 %v878
        %v923 = vunpack.c.l.b16 %v879
        %v924 = vunpack.c.h.b16 %v879
        %v925 = vunpack.c.l.b16 %v880
        %v926 = vunpack.c.h.b16 %v880
        %v927 = vunpack.c.l.b16 %v881
        %v928 = vunpack.c.h.b16 %v881
        %v929 = vunpack.c.l.b16 %v882
        %v930 = vunpack.c.h.b16 %v882
        %v931 = vpack.c.b16 %v899, %v899
        %v932 = vpack.c.b16 %v900, %v900
        %v933 = vpack.c.b16 %v901, %v901
        %v934 = vpack.c.b16 %v902, %v902
        %v935 = vpack.c.b16 %v903, %v903
        %v936 = vpack.c.b16 %v904, %v904
        %v937 = vpack.c.b16 %v905, %v905
        %v938 = vpack.c.b16 %v906, %v906
        %v939 = vpack.c.b16 %v907, %v907
        %v940 = vpack.c.b16 %v908, %v908
        %v941 = vpack.c.b16 %v909, %v909
        %v942 = vpack.c.b16 %v910, %v910
        %v943 = vpack.c.b16 %v911, %v911
        %v944 = vpack.c.b16 %v912, %v912
        %v945 = vpack.c.b16 %v913, %v913
        %v946 = vpack.c.b16 %v914, %v914
        %v947 = vpack.c.b16 %v915, %v915
        %v948 = vpack.c.b16 %v916, %v916
        %v949 = vpack.c.b16 %v917, %v917
        %v950 = vpack.c.b16 %v918, %v918
        %v951 = vpack.c.b16 %v919, %v919
        %v952 = vpack.c.b16 %v920, %v920
        %v953 = vpack.c.b16 %v921, %v921
        %v954 = vpack.c.b16 %v922, %v922
        %v955 = vpack.c.b16 %v923, %v923
        %v956 = vpack.c.b16 %v924, %v924
        %v957 = vpack.c.b16 %v925, %v925
        %v958 = vpack.c.b16 %v926, %v926
        %v959 = vpack.c.b16 %v927, %v927
        %v960 = vpack.c.b16 %v928, %v928
        %v961 = vpack.c.b16 %v929, %v929
        %v962 = vpack.c.b16 %v930, %v930
        %995 = vst [vmem:[%s254] sm:$0xf] %v931
        %996 = vst [vmem:[%s254 + $0x4] sm:$0xf] %v932
        %997 = vst [vmem:[%s254 + $0x8] sm:$0xf] %v933
        %998 = vst [vmem:[%s254 + $0xc] sm:$0xf] %v934
        %999 = vst [vmem:[%s254 + $0x10] sm:$0xf] %v935
        %1000 = vst [vmem:[%s254 + $0x14] sm:$0xf] %v936
        %1001 = vst [vmem:[%s254 + $0x18] sm:$0xf] %v937
        %1002 = vst [vmem:[%s254 + $0x1c] sm:$0xf] %v938
        %1003 = vst [vmem:[%s254 + $0x20] sm:$0xf] %v939
        %1004 = vst [vmem:[%s254 + $0x24] sm:$0xf] %v940
        %1005 = vst [vmem:[%s254 + $0x28] sm:$0xf] %v941
        %1006 = vst [vmem:[%s254 + $0x2c] sm:$0xf] %v942
        %1007 = vst [vmem:[%s254 + $0x30] sm:$0xf] %v943
        %1008 = vst [vmem:[%s254 + $0x34] sm:$0xf] %v944
        %1009 = vst [vmem:[%s254 + $0x38] sm:$0xf] %v945
        %1010 = vst [vmem:[%s254 + $0x3c] sm:$0xf] %v946
        %1011 = vst [vmem:[%s254 + $0x40] sm:$0xf] %v947
        %1012 = vst [vmem:[%s254 + $0x44] sm:$0xf] %v948
        %1013 = vst [vmem:[%s254 + $0x48] sm:$0xf] %v949
        %1014 = vst [vmem:[%s254 + $0x4c] sm:$0xf] %v950
        %1015 = vst [vmem:[%s254 + $0x50] sm:$0xf] %v951
        %1016 = vst [vmem:[%s254 + $0x54] sm:$0xf] %v952
        %1017 = vst [vmem:[%s254 + $0x58] sm:$0xf] %v953
        %1018 = vst [vmem:[%s254 + $0x5c] sm:$0xf] %v954
        %1019 = vst [vmem:[%s254 + $0x60] sm:$0xf] %v955
        %1020 = vst [vmem:[%s254 + $0x64] sm:$0xf] %v956
        %1021 = vst [vmem:[%s254 + $0x68] sm:$0xf] %v957
        %1022 = vst [vmem:[%s254 + $0x6c] sm:$0xf] %v958
        %1023 = vst [vmem:[%s254 + $0x70] sm:$0xf] %v959
        %1024 = vst [vmem:[%s254 + $0x74] sm:$0xf] %v960
        %1025 = vst [vmem:[%s254 + $0x78] sm:$0xf] %v961
        %1026 = vst [vmem:[%s254 + $0x7c] sm:$0xf] %v962
        %v1027 = vpack.c.bf16 %v515, %v511
        %v1028 = vpack.c.bf16 %v705, %v702
        %v1029 = vpack.c.bf16 %v525, %v521
        %v1030 = vpack.c.bf16 %v713, %v710
        %v1031 = vpack.c.bf16 %v535, %v531
        %v1032 = vpack.c.bf16 %v721, %v718
        %v1033 = vpack.c.bf16 %v545, %v541
        %v1034 = vpack.c.bf16 %v729, %v726
        %v1035 = vpack.c.bf16 %v555, %v551
        %v1036 = vpack.c.bf16 %v737, %v734
        %v1037 = vpack.c.bf16 %v565, %v561
        %v1038 = vpack.c.bf16 %v745, %v742
        %v1039 = vpack.c.bf16 %v575, %v571
        %v1040 = vpack.c.bf16 %v753, %v750
        %v1041 = vpack.c.bf16 %v585, %v581
        %v1042 = vpack.c.bf16 %v761, %v758
        %v1043 = vpack.c.bf16 %v595, %v591
        %v1044 = vpack.c.bf16 %v769, %v766
        %v1045 = vpack.c.bf16 %v605, %v601
        %v1046 = vpack.c.bf16 %v777, %v774
        %v1047 = vpack.c.bf16 %v615, %v611
        %v1048 = vpack.c.bf16 %v785, %v782
        %v1049 = vpack.c.bf16 %v625, %v621
        %v1050 = vpack.c.bf16 %v793, %v790
        %v1051 = vpack.c.bf16 %v635, %v631
        %v1052 = vpack.c.bf16 %v801, %v798
        %v1053 = vpack.c.bf16 %v645, %v641
        %v1054 = vpack.c.bf16 %v809, %v806
        %v1055 = vpack.c.bf16 %v655, %v651
        %v1056 = vpack.c.bf16 %v817, %v814
        %v1057 = vpack.c.bf16 %v665, %v661
        %v1058 = vpack.c.bf16 %v825, %v822
        %v1091 = vunpack.c.l.b16 %v1027
        %v1092 = vunpack.c.l.b16 %v1028
        %v1093 = vunpack.c.h.b16 %v1027
        %v1094 = vunpack.c.h.b16 %v1028
        %v1095 = vunpack.c.l.b16 %v1029
        %v1096 = vunpack.c.l.b16 %v1030
        %v1097 = vunpack.c.h.b16 %v1029
        %v1098 = vunpack.c.h.b16 %v1030
        %v1099 = vunpack.c.l.b16 %v1031
        %v1100 = vunpack.c.l.b16 %v1032
        %v1101 = vunpack.c.h.b16 %v1031
        %v1102 = vunpack.c.h.b16 %v1032
        %v1103 = vunpack.c.l.b16 %v1033
        %v1104 = vunpack.c.l.b16 %v1034
        %v1105 = vunpack.c.h.b16 %v1033
        %v1106 = vunpack.c.h.b16 %v1034
        %v1107 = vunpack.c.l.b16 %v1035
        %v1108 = vunpack.c.l.b16 %v1036
        %v1109 = vunpack.c.h.b16 %v1035
        %v1110 = vunpack.c.h.b16 %v1036
        %v1111 = vunpack.c.l.b16 %v1037
        %v1112 = vunpack.c.l.b16 %v1038
        %v1113 = vunpack.c.h.b16 %v1037
        %v1114 = vunpack.c.h.b16 %v1038
        %v1115 = vunpack.c.l.b16 %v1039
        %v1116 = vunpack.c.l.b16 %v1040
        %v1117 = vunpack.c.h.b16 %v1039
        %v1118 = vunpack.c.h.b16 %v1040
        %v1119 = vunpack.c.l.b16 %v1041
        %v1120 = vunpack.c.l.b16 %v1042
        %v1121 = vunpack.c.h.b16 %v1041
        %v1122 = vunpack.c.h.b16 %v1042
        %v1123 = vunpack.c.l.b16 %v1043
        %v1124 = vunpack.c.l.b16 %v1044
        %v1125 = vunpack.c.h.b16 %v1043
        %v1126 = vunpack.c.h.b16 %v1044
        %v1127 = vunpack.c.l.b16 %v1045
        %v1128 = vunpack.c.l.b16 %v1046
        %v1129 = vunpack.c.h.b16 %v1045
        %v1130 = vunpack.c.h.b16 %v1046
        %v1131 = vunpack.c.l.b16 %v1047
        %v1132 = vunpack.c.l.b16 %v1048
        %v1133 = vunpack.c.h.b16 %v1047
        %v1134 = vunpack.c.h.b16 %v1048
        %v1135 = vunpack.c.l.b16 %v1049
        %v1136 = vunpack.c.l.b16 %v1050
        %v1137 = vunpack.c.h.b16 %v1049
        %v1138 = vunpack.c.h.b16 %v1050
        %v1139 = vunpack.c.l.b16 %v1051
        %v1140 = vunpack.c.l.b16 %v1052
        %v1141 = vunpack.c.h.b16 %v1051
        %v1142 = vunpack.c.h.b16 %v1052
        %v1143 = vunpack.c.l.b16 %v1053
        %v1144 = vunpack.c.l.b16 %v1054
        %v1145 = vunpack.c.h.b16 %v1053
        %v1146 = vunpack.c.h.b16 %v1054
        %v1147 = vunpack.c.l.b16 %v1055
        %v1148 = vunpack.c.l.b16 %v1056
        %v1149 = vunpack.c.h.b16 %v1055
        %v1150 = vunpack.c.h.b16 %v1056
        %v1151 = vunpack.c.l.b16 %v1057
        %v1152 = vunpack.c.l.b16 %v1058
        %v1153 = vunpack.c.h.b16 %v1057
        %v1154 = vunpack.c.h.b16 %v1058
        %v1155 = vpack.c.b16 %v1092, %v1091
        %v1156 = vpack.c.b16 %v1094, %v1093
        %v1157 = vpack.c.b16 %v1096, %v1095
        %v1158 = vpack.c.b16 %v1098, %v1097
        %v1159 = vpack.c.b16 %v1100, %v1099
        %v1160 = vpack.c.b16 %v1102, %v1101
        %v1161 = vpack.c.b16 %v1104, %v1103
        %v1162 = vpack.c.b16 %v1106, %v1105
        %v1163 = vpack.c.b16 %v1108, %v1107
        %v1164 = vpack.c.b16 %v1110, %v1109
        %v1165 = vpack.c.b16 %v1112, %v1111
        %v1166 = vpack.c.b16 %v1114, %v1113
        %v1167 = vpack.c.b16 %v1116, %v1115
        %v1168 = vpack.c.b16 %v1118, %v1117
        %v1169 = vpack.c.b16 %v1120, %v1119
        %v1170 = vpack.c.b16 %v1122, %v1121
        %v1171 = vpack.c.b16 %v1124, %v1123
        %v1172 = vpack.c.b16 %v1126, %v1125
        %v1173 = vpack.c.b16 %v1128, %v1127
        %v1174 = vpack.c.b16 %v1130, %v1129
        %v1175 = vpack.c.b16 %v1132, %v1131
        %v1176 = vpack.c.b16 %v1134, %v1133
        %v1177 = vpack.c.b16 %v1136, %v1135
        %v1178 = vpack.c.b16 %v1138, %v1137
        %v1179 = vpack.c.b16 %v1140, %v1139
        %v1180 = vpack.c.b16 %v1142, %v1141
        %v1181 = vpack.c.b16 %v1144, %v1143
        %v1182 = vpack.c.b16 %v1146, %v1145
        %v1183 = vpack.c.b16 %v1148, %v1147
        %v1184 = vpack.c.b16 %v1150, %v1149
        %v1185 = vpack.c.b16 %v1152, %v1151
        %v1186 = vpack.c.b16 %v1154, %v1153
        %1219 = vst [vmem:[%s261] sm:$0xff] %v1155
        %1220 = vst [vmem:[%s261 + $0x8] sm:$0xff] %v1156
        %1221 = vst [vmem:[%s261 + $0x10] sm:$0xff] %v1157
        %1222 = vst [vmem:[%s261 + $0x18] sm:$0xff] %v1158
        %1223 = vst [vmem:[%s261 + $0x20] sm:$0xff] %v1159
        %1224 = vst [vmem:[%s261 + $0x28] sm:$0xff] %v1160
        %1225 = vst [vmem:[%s261 + $0x30] sm:$0xff] %v1161
        %1226 = vst [vmem:[%s261 + $0x38] sm:$0xff] %v1162
        %1227 = vst [vmem:[%s261 + $0x40] sm:$0xff] %v1163
        %1228 = vst [vmem:[%s261 + $0x48] sm:$0xff] %v1164
        %1229 = vst [vmem:[%s261 + $0x50] sm:$0xff] %v1165
        %1230 = vst [vmem:[%s261 + $0x58] sm:$0xff] %v1166
        %1231 = vst [vmem:[%s261 + $0x60] sm:$0xff] %v1167
        %1232 = vst [vmem:[%s261 + $0x68] sm:$0xff] %v1168
        %1233 = vst [vmem:[%s261 + $0x70] sm:$0xff] %v1169
        %1234 = vst [vmem:[%s261 + $0x78] sm:$0xff] %v1170
        %1235 = vst [vmem:[%s261 + $0x80] sm:$0xff] %v1171
        %1236 = vst [vmem:[%s261 + $0x88] sm:$0xff] %v1172
        %1237 = vst [vmem:[%s261 + $0x90] sm:$0xff] %v1173
        %1238 = vst [vmem:[%s261 + $0x98] sm:$0xff] %v1174
        %1239 = vst [vmem:[%s261 + $0xa0] sm:$0xff] %v1175
        %1240 = vst [vmem:[%s261 + $0xa8] sm:$0xff] %v1176
        %1241 = vst [vmem:[%s261 + $0xb0] sm:$0xff] %v1177
        %1242 = vst [vmem:[%s261 + $0xb8] sm:$0xff] %v1178
        %1243 = vst [vmem:[%s261 + $0xc0] sm:$0xff] %v1179
        %1244 = vst [vmem:[%s261 + $0xc8] sm:$0xff] %v1180
        %1245 = vst [vmem:[%s261 + $0xd0] sm:$0xff] %v1181
        %1246 = vst [vmem:[%s261 + $0xd8] sm:$0xff] %v1182
        %1247 = vst [vmem:[%s261 + $0xe0] sm:$0xff] %v1183
        %1248 = vst [vmem:[%s261 + $0xe8] sm:$0xff] %v1184
        %1249 = vst [vmem:[%s261 + $0xf0] sm:$0xff] %v1185
        %1250 = vst [vmem:[%s261 + $0xf8] sm:$0xff] %v1186
        %s1251 = sand.u32 %s118, 1
        %s1252 = scalar_lea.sflag [#allocation4], %s1251
        %s1253 = sand.u32 %s118, 1
        %s1254 = smul.addr %s1253, 128
        %s1255 = scalar_lea.vmem [#allocation7], %s1254
        %s1256 = sand.u32 %s146, 1
        %s1257 = scalar_lea.sflag [#allocation9], %s1256
        %s1258 = sand.u32 %s146, 1
        %s1259 = smul.addr %s1258, 256
        %s1260 = scalar_lea.vmem [#allocation8], %s1259
        // Predicated region
        $region41: #{tpu_custom_call.1} parent=31 // pred_check
          %p1261 = pneg %p128
        $region42: #{tpu_custom_call.1} parent=31 // pred_check_branch
          %1263 = sbr.rel (%p1261) target = $region44
        $region43: #{tpu_custom_call.1} parent=31 // pred_region
          %s1264 = smul.u32 32, %s31
          %s1266 = ssub.s32 2048, 2048
          %1267 = vsyncadd %s1252, %s1266
          %s1268 = smul.addr %s30, 32
          %s1269 = sadd.s32 %s1264, %s1268
          %s1270 = smul.addr %s1269, 64
          %s1271 = scalar_lea.hbm %s3, %s1270
          %s1272 = sshll.u32 %s1255, 4
          %s1273 = int_to_ptr.vmem [resolvable:$true] %s1272
          %1278 = dma.vmem_to_hbm [thread:$0]  %s1273, 2048, %s1271, %s1252, 64, 64, 4
        $region44: #{tpu_custom_call.1} parent=31 // pred_fallthru
          _
        // Predicated region
        $region45: #{tpu_custom_call.1} parent=31 // pred_check
          %p1279 = pneg %p156
        $region46: #{tpu_custom_call.1} parent=31 // pred_check_branch
          %1281 = sbr.rel (%p1279) target = $region48
        $region47: #{tpu_custom_call.1} parent=31 // pred_region
          %s1282 = smul.u32 32, %s31
          %s1284 = ssub.s32 4096, 4096
          %1285 = vsyncadd %s1257, %s1284
          %s1286 = smul.addr %s1282, 2
          %s1287 = smul.addr %s30, 64
          %s1288 = sadd.s32 %s1286, %s1287
          %s1289 = smul.addr %s1288, 64
          %s1290 = scalar_lea.hbm %s4, %s1289
          %s1291 = sshll.u32 %s1260, 4
          %s1292 = int_to_ptr.vmem [resolvable:$true] %s1291
          %1297 = dma.vmem_to_hbm [thread:$0]  %s1292, 4096, %s1290, %s1257, 128, 128, 8
        $region48: #{tpu_custom_call.1} parent=31 // pred_fallthru
          _
      $region32: #{tpu_custom_call.1} parent=5 // pred_fallthru
        _
      %p1298 = scmp.le.s32.totalorder 2, %s21
      // Predicated region
      $region49: #{tpu_custom_call.1} parent=5 // pred_check
        %p1299 = pneg %p1298
      $region50: #{tpu_custom_call.1} parent=5 // pred_check_branch
        %1301 = sbr.rel (%p1299) target = $region52
      $region51: #{tpu_custom_call.1} parent=5 // pred_region
        %s1302 = ssub.s32 %s21, 2
        // Predicated region
        $region53: #{tpu_custom_call.1} parent=51 // pred_check
          %p1303 = pneg %p134
        $region54: #{tpu_custom_call.1} parent=51 // pred_check_branch
          %1305 = sbr.rel (%p1303) target = $region56
        $region55: #{tpu_custom_call.1} parent=51 // pred_region
          %s1306 = sand.u32 %s119, 1
          %s1307 = scalar_lea.sflag [#allocation4], %s1306
          %s1308 = sand.u32 %s119, 1
          %s1309 = smul.addr %s1308, 128
          %s1310 = scalar_lea.vmem [#allocation7], %s1309
          %1311 = dma.done %s1307, 2048
        $region56: #{tpu_custom_call.1} parent=51 // pred_fallthru
          _
        // Predicated region
        $region57: #{tpu_custom_call.1} parent=51 // pred_check
          %p1312 = pneg %p162
        $region58: #{tpu_custom_call.1} parent=51 // pred_check_branch
          %1314 = sbr.rel (%p1312) target = $region60
        $region59: #{tpu_custom_call.1} parent=51 // pred_region
          %s1315 = sand.u32 %s147, 1
          %s1316 = scalar_lea.sflag [#allocation9], %s1315
          %s1317 = sand.u32 %s147, 1
          %s1318 = smul.addr %s1317, 256
          %s1319 = scalar_lea.vmem [#allocation8], %s1318
          %1320 = dma.done %s1316, 4096
        $region60: #{tpu_custom_call.1} parent=51 // pred_fallthru
          _
      $region52: #{tpu_custom_call.1} parent=5 // pred_fallthru
        _
    $region6: #{tpu_custom_call.1} parent=1 // loop_footer
      %s25 = sadd.s32 1, %s21
    $region7: #{tpu_custom_call.1} parent=1 // loop_footer_branch
      %20 = sbr.rel target = $region3
    $region8: #{tpu_custom_call.1} parent=1 // loop_exit
      _
    %1321 = vsyncpa [#allocation3], 1
    %s1322 = scalar_lea.sflag [#allocation3], 1
    %1323 = vsyncpa %s1322, 1
    %1324 = vsyncpa [#allocation6], 1
    %1325 = vsyncpa [#allocation4], 1
    %s1326 = scalar_lea.sflag [#allocation4], 1
    %1327 = vsyncpa %s1326, 1
    %1328 = vsyncpa [#allocation9], 1
    %s1329 = scalar_lea.sflag [#allocation9], 1
    %1330 = vsyncpa %s1329, 1

</llo_original>
